<compile_context>
chip_gen: v6e
topology: v6e:2x2x1
jax: 0.10.0
libtpu: 0.0.40
codegen_flags: <defaults>
</compile_context>

<pallas_src>
import jax
import jax.numpy as jnp
from jax.experimental import pallas as pl
from jax.experimental.pallas import tpu as pltpu

_LANES = 128                       # vreg lane width (same on v5e / v6e / v7x)
_WIDE_LANES = 1024                 # 8 x 128: lane-dense slab when divisible
_TARGET_BLOCK_BYTES = 4 << 20      # ~4 MiB blocks: amortizes ~0.35 us/step overhead
_FALLBACK_VMEM_BYTES = 64 << 20    # conservative: v7x per-TC physical VMEM


def _copy_kernel(x_ref, o_ref):
    # Whole-tile copy: mem-bound, full-vreg unmasked vld/vst per (8,128) tile.
    o_ref[...] = x_ref[...]


def _vmem_budget_bytes() -> int:
    """Per-generation VMEM capacity (128 MiB v5e/v6e, 64 MiB v7x)."""
    try:
        return int(pltpu.get_tpu_info().vmem_capacity_bytes)
    except Exception:
        return _FALLBACK_VMEM_BYTES


def copy_pallas(x: jax.Array) -> jax.Array:
    """Lane-dense, VMEM-budgeted copy (sanity-check kernel).

    Reshapes the input into a (rows, lanes) slab with lanes in {1024, 128},
    tiles rows into ~4 MiB blocks capped against the queried VMEM capacity,
    and copies it back out bit-exactly.  Pad/slice are skipped for
    lane-aligned inputs.
    """
    orig_shape = x.shape
    n = x.size
    itemsize = jnp.dtype(x.dtype).itemsize

    # Prefer the wide (rows, 1024) slab; fall back to 128 lanes (+pad) otherwise.
    lanes = _WIDE_LANES if n % _WIDE_LANES == 0 else _LANES

    flat = x.reshape(-1)
    pad = (-n) % lanes
    if pad:  # only pay the extra HBM<->HBM pad copy for unaligned inputs
        flat = jnp.pad(flat, (0, pad))
    rows = flat.size // lanes
    x2 = flat.reshape(rows, lanes)

    # Row tile: ~4 MiB blocks, multiple of 8 sublanes, capped so that
    # (in + out) x double-buffering = 4 x block_bytes stays <= half the
    # per-generation VMEM budget (v7x: 64 MiB, v5e/v6e: 128 MiB).
    row_bytes = lanes * itemsize
    budget = _vmem_budget_bytes()
    target_rows = max(8, (_TARGET_BLOCK_BYTES // row_bytes) // 8 * 8)
    cap_rows = max(8, ((budget // 8) // row_bytes) // 8 * 8)
    row_tile = min(target_rows, cap_rows)

    if rows <= row_tile:
        # Single whole-array block: legal even if rows % 8 != 0 (block == full dims).
        row_tile = rows
    grid = (pl.cdiv(rows, row_tile),)

    block_bytes = row_tile * row_bytes
    # Explicit limit so v5e's 16 MiB scoped-VMEM default can't OOM big blocks.
    vmem_limit = int(min(budget, max(4 * block_bytes + (2 << 20), 16 << 20)))

    y2 = pl.pallas_call(
        _copy_kernel,
        out_shape=jax.ShapeDtypeStruct((rows, lanes), x2.dtype),
        grid=grid,
        in_specs=[
            pl.BlockSpec(
                (row_tile, lanes),
                lambda i: (i, 0),
                memory_space=pltpu.MemorySpace.VMEM,
            )
        ],
        out_specs=pl.BlockSpec(
            (row_tile, lanes),
            lambda i: (i, 0),
            memory_space=pltpu.MemorySpace.VMEM,
        ),
        compiler_params=pltpu.CompilerParams(
            dimension_semantics=("parallel",),
            vmem_limit_bytes=vmem_limit,
        ),
    )(x2)

    if pad:
        return y2.reshape(-1)[:n].reshape(orig_shape)
    return y2.reshape(orig_shape)


class ImgEncoder:
    """JAX/Pallas port of model/cond_emb.py::ImgEncoder."""

    def __init__(self):
        # Reference __init__ defines no parameters; nothing to initialize.
        pass

    def forward(self):
        # TODO(synk): reference forward() body is empty (`return`) — it returns
        # None and performs no computation, so there is nothing to lower.
        # When the real encoder body (patch-embed / conv front-end) lands,
        # lower it as im2col + jnp.dot (bf16 in, f32 accumulate), reduction
        # axis last in the grid, with per-generation tiles:
        #   * v6e/v7x: K/N tiles multiples of 256 (2x256^2 MXU); v5e: 128 is
        #     enough (4x128^2 MXU),
        #   * v7x: plan bf16/fp8 weights (no int8 MXU path) and re-derive the
        #     im2col + weight double-buffer budget for its 64 MiB VMEM,
        #   * keep the output last dim lane-dense (multiple of 128).
        return None

    __call__ = forward


if __name__ == "__main__":
    key = jax.random.PRNGKey(0)

    # Small NCHW example input consistent with an image-encoder front-end.
    # 2*4*16*16 = 2048 elements -> lane-aligned wide slab (2, 1024), no pad.
    x = jax.random.normal(key, (2, 4, 16, 16), dtype=jnp.float32)
    y = copy_pallas(x)
    jax.block_until_ready(y)
    assert y.shape == x.shape and y.dtype == x.dtype
    assert bool(jnp.array_equal(y, x))  # identity copy must be bit-exact

    # Also exercise the unaligned (pad) path once with a tiny tensor.
    x_odd = jax.random.normal(jax.random.PRNGKey(1), (3, 5, 7), dtype=jnp.float32)
    y_odd = copy_pallas(x_odd)
    jax.block_until_ready(y_odd)
    assert bool(jnp.array_equal(y_odd, x_odd))

    # Exercise the (no-op) module forward exactly as in PyTorch.
    enc = ImgEncoder()
    out = enc.forward()
    assert out is None  # matches the reference semantics exactly

    print("KERNEL_OK")
</pallas_src>

<mosaic_0001>
module attributes {stable_mosaic.version = 11 : i64} {
  func.func @_copy_kernel(%arg0: i32, %arg1: memref<2x1024xf32, #tpu.memory_space<vmem>>, %arg2: memref<2x1024xf32, #tpu.memory_space<vmem>>) attributes {dimension_semantics = [#tpu.dimension_semantics<parallel>], iteration_bounds = array<i64: 1>, scalar_prefetch = 0 : i64, scratch_operands = 0 : i64, tpu.core_type = #tpu.core_type<tc>, window_params = [{transform_indices = @transform_0, window_bounds = array<i64: 2, 1024>}, {transform_indices = @transform_1, window_bounds = array<i64: 2, 1024>}]} {
    %c0 = arith.constant 0 : index
    %c0_0 = arith.constant 0 : index
    %0 = vector.load %arg1[%c0, %c0_0] : memref<2x1024xf32, #tpu.memory_space<vmem>>, vector<2x1024xf32>
    %c0_1 = arith.constant 0 : index
    %c0_2 = arith.constant 0 : index
    %1 = vector.load %arg2[%c0_1, %c0_2] : memref<2x1024xf32, #tpu.memory_space<vmem>>, vector<2x1024xf32>
    tpu.vector_store %arg2[%c0_1, %c0_2], %0 {strides = array<i32>} : memref<2x1024xf32, #tpu.memory_space<vmem>>, vector<2x1024xf32>,
    return
  }
  func.func @transform_0(%arg0: i32) -> (i32, i32) {
    %c0_i32 = arith.constant 0 : i32
    %c0_i32_0 = arith.constant 0 : i32
    return %arg0, %c0_i32 : i32, i32
  }
  func.func @transform_1(%arg0: i32) -> (i32, i32) {
    %c0_i32 = arith.constant 0 : i32
    %c0_i32_0 = arith.constant 0 : i32
    return %arg0, %c0_i32 : i32, i32
  }
}

</mosaic_0001>

<llo_original>
// kernel: tpu_custom_call.1
$region0: #{tpu_custom_call.1}
  #allocation0 [shape = 'u32[]', space=smem, size = 0x4, offset = 0x4, fixed_abs, tag = 'smem constant byte address 0x4 - core index']
  #allocation1 [shape = 'u32[144,128]{1,0:T(1,128)}', space=vmem, size = 0x12000, scoped, tag = 'internal scratch']
  %s0 = inlined_call_operand.hbm [shape: f32[2,1024], index: 0, kind: input, shape index: {}]
  %s1 = inlined_call_operand.hbm [shape: f32[2,1024], index: 1, kind: output, shape index: {}]
  %s2 = sld [smem:[#allocation0]]
  $region18: #{tpu_custom_call.1} parent=0
    _
  %s4 = ssub.s32 1, %s2
  %s5 = scalar_select 0, %s4, %s2
  $region1: #{tpu_custom_call.1} parent=0
    #allocation2 [shape = 'u8[8192]{0}', space=vmem, size = 0x2000, scoped, tag = 'input window, operand 0, single buffered']
    #allocation3 [shape = 's32[1]{0}', space=sflag, size = 0x4, scoped, tag = 'scoped memory for tpu_custom_call.1']
    #allocation4 [shape = 's32[1]{0}', space=sflag, size = 0x4, scoped, tag = 'scoped memory for tpu_custom_call.1']
    #allocation5 [shape = 'u8[8192]{0}', space=vmem, size = 0x2000, scoped, tag = 'output window, operand 0, single buffered']
    %6 = vsyncpa [#allocation3], 0
    %7 = vsyncpa [#allocation4], 0
    // Predicated region
    $region2: #{tpu_custom_call.1} parent=1 // pred_check
      _
    $region3: #{tpu_custom_call.1} parent=1 // pred_check_branch
      %9 = sbr.rel (0) target = $region5
    $region4: #{tpu_custom_call.1} parent=1 // pred_region
      %s11 = ssub.s32 256, 256
      %12 = vsyncadd [#allocation3], %s11
      %s14 = sshll.u32 [#allocation2], 4
      %s15 = int_to_ptr.vmem [resolvable:$true] %s14
      %17 = dma.hbm_to_vmem [thread:$0]  %s0, 256, %s15, [#allocation3]
    $region5: #{tpu_custom_call.1} parent=1 // pred_fallthru
      _
    // Predicated region
    $region6: #{tpu_custom_call.1} parent=1 // pred_check
      _
    $region7: #{tpu_custom_call.1} parent=1 // pred_check_branch
      %19 = sbr.rel (0) target = $region9
    $region8: #{tpu_custom_call.1} parent=1 // pred_region
      %20 = dma.done [#allocation3], 256
    $region9: #{tpu_custom_call.1} parent=1 // pred_fallthru
      _
    %v21 = vld [vmem:[#allocation2] sm:$0xff]
    %v22 = vld [vmem:[#allocation2 + $0x8] sm:$0xff]
    %23 = vst [vmem:[#allocation5] sm:$0xff] %v21
    %24 = vst [vmem:[#allocation5 + $0x8] sm:$0xff] %v22
    // Predicated region
    $region10: #{tpu_custom_call.1} parent=1 // pred_check
      _
    $region11: #{tpu_custom_call.1} parent=1 // pred_check_branch
      %26 = sbr.rel (0) target = $region13
    $region12: #{tpu_custom_call.1} parent=1 // pred_region
      %s28 = ssub.s32 256, 256
      %29 = vsyncadd [#allocation4], %s28
      %s31 = sshll.u32 [#allocation5], 4
      %s32 = int_to_ptr.vmem [resolvable:$true] %s31
      %34 = dma.vmem_to_hbm [thread:$0]  %s32, 256, %s1, [#allocation4]
    $region13: #{tpu_custom_call.1} parent=1 // pred_fallthru
      _
    // Predicated region
    $region14: #{tpu_custom_call.1} parent=1 // pred_check
      _
    $region15: #{tpu_custom_call.1} parent=1 // pred_check_branch
      %36 = sbr.rel (0) target = $region17
    $region16: #{tpu_custom_call.1} parent=1 // pred_region
      %37 = dma.done [#allocation4], 256
    $region17: #{tpu_custom_call.1} parent=1 // pred_fallthru
      _
    %38 = vsyncpa [#allocation3], 1
    %39 = vsyncpa [#allocation4], 1

</llo_original>
